<compile_context>
chip_gen: v7x
topology: tpu7x:2x2x1
jax: 0.10.0
libtpu: 0.0.40
codegen_flags: <defaults>
</compile_context>

<pallas_src>
import jax
import jax.numpy as jnp
from jax.experimental import pallas as pl
from jax.experimental.pallas import tpu as pltpu


def relu_network_kernel(x_ref, params_ref, db_ref, o_ref):
    x = x_ref[...]                    # (B, 2)  f32, VMEM
    w0_row0 = params_ref[0:1, :]      # (1, H)  first row of w0
    w0_row1 = params_ref[1:2, :]      # (1, H)  second row of w0
    b0 = params_ref[2:3, :]           # (1, H)
    dw = params_ref[3:4, :]           # (1, H)  w1[:,1] - w1[:,0]

    # --- Layer 0: Linear(2, H) with K=2 unrolled on the VPU, then ReLU ---
    h = jnp.maximum(x[:, 0:1] * w0_row0 + x[:, 1:2] * w0_row1 + b0, 0.0)  # (B, H)

    # --- Layer 1 + 2-class softmax == sigmoid of the logit difference ---
    d = jnp.sum(h * dw, axis=-1, keepdims=True) + db_ref[0]   # (B, 1)
    p1 = jax.nn.sigmoid(d)                                    # EUP
    p0 = 1.0 - p1

    # Output assembly: two static slice stores (no iota, no select).
    o_ref[:, 0:1] = p0.astype(o_ref.dtype)
    o_ref[:, 1:2] = p1.astype(o_ref.dtype)


def pack_relu_network_params(w0, b0, w1, b1):
    """Pack parameters once (at init time) into kernel-friendly buffers.

    w0: (2, H), b0: (H,), w1: (H, 2), b1: (2,)
    Returns:
      packed: (4, H) f32  -- rows [w0[0], w0[1], b0, w1[:,1]-w1[:,0]]
      db:     (1,)  f32   -- b1[1] - b1[0]
    """
    H = w0.shape[1]
    assert w0.shape == (2, H) and b0.shape == (H,)
    assert w1.shape == (H, 2) and b1.shape == (2,)
    packed = jnp.concatenate(
        [
            w0.astype(jnp.float32),                               # rows 0-1
            b0.reshape(1, H).astype(jnp.float32),                 # row 2
            (w1[:, 1] - w1[:, 0]).reshape(1, H).astype(jnp.float32),  # row 3
        ],
        axis=0,
    )
    db = (b1[1] - b1[0]).reshape(1).astype(jnp.float32)
    return packed, db


def relu_network_forward(x, packed_params, db):
    """x: (B, 2) f32; packed_params: (4, H); db: (1,) -> (B, 2) softmax probs."""
    B, din = x.shape
    assert din == 2 and packed_params.shape[0] == 4 and db.shape == (1,)

    return pl.pallas_call(
        relu_network_kernel,
        out_shape=jax.ShapeDtypeStruct((B, 2), jnp.float32),
        in_specs=[
            pl.BlockSpec(memory_space=pltpu.VMEM),   # x
            pl.BlockSpec(memory_space=pltpu.VMEM),   # packed params (4, H)
            pl.BlockSpec(memory_space=pltpu.SMEM),   # db scalar
        ],
        out_specs=pl.BlockSpec(memory_space=pltpu.VMEM),
    )(x.astype(jnp.float32), packed_params, db)


if __name__ == "__main__":
    key = jax.random.PRNGKey(0)
    k_x, k_w0, k_b0, k_w1, k_b1 = jax.random.split(key, 5)

    batch = 8
    hidden = 32   # ReLUNetwork(hidden_size=32): Linear(2,32) -> ReLU -> Linear(32,2) -> softmax

    x = jax.random.normal(k_x, (batch, 2), dtype=jnp.float32)
    w0 = jax.random.normal(k_w0, (2, hidden), dtype=jnp.float32)
    b0 = jax.random.normal(k_b0, (hidden,), dtype=jnp.float32)
    w1 = jax.random.normal(k_w1, (hidden, 2), dtype=jnp.float32)
    b1 = jax.random.normal(k_b1, (2,), dtype=jnp.float32)

    # Pack once at parameter-init time (not per forward call).
    packed_params, db = pack_relu_network_params(w0, b0, w1, b1)

    out = relu_network_forward(x, packed_params, db)
    out = jax.block_until_ready(out)

    # Pure-JAX reference (HIGHEST precision so the reference matmul doesn't
    # introduce bf16-pass error vs the kernel's exact f32 VPU math).
    h_ref = jnp.maximum(
        jnp.dot(x, w0, precision=jax.lax.Precision.HIGHEST) + b0, 0.0)
    logits_ref = jnp.dot(h_ref, w1, precision=jax.lax.Precision.HIGHEST) + b1
    ref = jax.nn.softmax(logits_ref, axis=-1)

    assert out.shape == (batch, 2)
    assert jnp.allclose(out, ref, atol=1e-5, rtol=1e-5), "mismatch vs reference"
    assert jnp.allclose(jnp.sum(out, axis=-1), 1.0, atol=1e-6), "rows must sum to 1"

    print("KERNEL_OK")
</pallas_src>

<mosaic_0001>
module attributes {stable_mosaic.version = 11 : i64} {
  func.func @relu_network_kernel(%arg0: memref<8x2xf32, #tpu.memory_space<vmem>>, %arg1: memref<4x32xf32, #tpu.memory_space<vmem>>, %arg2: memref<1xf32, #tpu.memory_space<smem>>, %arg3: memref<8x2xf32, #tpu.memory_space<vmem>>) attributes {dimension_semantics = [], scalar_prefetch = 0 : i64, scratch_operands = 0 : i64, tpu.core_type = #tpu.core_type<tc>} {
    %c0 = arith.constant 0 : index
    %c0_0 = arith.constant 0 : index
    %0 = vector.load %arg0[%c0, %c0_0] : memref<8x2xf32, #tpu.memory_space<vmem>>, vector<8x2xf32>
    %c0_1 = arith.constant 0 : index
    %c0_2 = arith.constant 0 : index
    %1 = vector.load %arg1[%c0_1, %c0_2] : memref<4x32xf32, #tpu.memory_space<vmem>>, vector<1x32xf32>
    %c1 = arith.constant 1 : index
    %c0_3 = arith.constant 0 : index
    %2 = vector.load %arg1[%c1, %c0_3] : memref<4x32xf32, #tpu.memory_space<vmem>>, vector<1x32xf32>
    %c2 = arith.constant 2 : index
    %c0_4 = arith.constant 0 : index
    %3 = vector.load %arg1[%c2, %c0_4] : memref<4x32xf32, #tpu.memory_space<vmem>>, vector<1x32xf32>
    %c3 = arith.constant 3 : index
    %c0_5 = arith.constant 0 : index
    %4 = vector.load %arg1[%c3, %c0_5] : memref<4x32xf32, #tpu.memory_space<vmem>>, vector<1x32xf32>
    %5 = vector.extract_strided_slice %0 {offsets = [0, 0], sizes = [8, 1], strides = [1, 1]} : vector<8x2xf32> to vector<8x1xf32>
    %6 = vector.broadcast %5 : vector<8x1xf32> to vector<8x32xf32>
    %7 = vector.broadcast %1 : vector<1x32xf32> to vector<8x32xf32>
    %8 = arith.mulf %6, %7 : vector<8x32xf32>
    %9 = vector.extract_strided_slice %0 {offsets = [0, 1], sizes = [8, 1], strides = [1, 1]} : vector<8x2xf32> to vector<8x1xf32>
    %10 = vector.broadcast %9 : vector<8x1xf32> to vector<8x32xf32>
    %11 = vector.broadcast %2 : vector<1x32xf32> to vector<8x32xf32>
    %12 = arith.mulf %10, %11 : vector<8x32xf32>
    %13 = arith.addf %8, %12 : vector<8x32xf32>
    %14 = vector.broadcast %3 : vector<1x32xf32> to vector<8x32xf32>
    %15 = arith.addf %13, %14 : vector<8x32xf32>
    %cst = arith.constant 0.000000e+00 : f32
    %16 = vector.broadcast %cst : f32 to vector<8x32xf32>
    %17 = arith.maximumf %15, %16 : vector<8x32xf32>
    %18 = vector.broadcast %4 : vector<1x32xf32> to vector<8x32xf32>
    %19 = arith.mulf %17, %18 : vector<8x32xf32>
    %cst_6 = arith.constant dense<0.000000e+00> : vector<8xf32>
    %20 = vector.multi_reduction <add>, %19, %cst_6 [1] : vector<8x32xf32> to vector<8xf32>
    %21 = vector.shape_cast %20 : vector<8xf32> to vector<8x1xf32>
    %c0_7 = arith.constant 0 : index
    %22 = memref.load %arg2[%c0_7] : memref<1xf32, #tpu.memory_space<smem>>
    %23 = vector.broadcast %22 : f32 to vector<8x1xf32>
    %24 = arith.addf %21, %23 : vector<8x1xf32>
    %25 = arith.negf %24 : vector<8x1xf32>
    %26 = math.exp %25 : vector<8x1xf32>
    %cst_8 = arith.constant 1.000000e+00 : f32
    %27 = vector.broadcast %cst_8 : f32 to vector<8x1xf32>
    %28 = arith.addf %27, %26 : vector<8x1xf32>
    %29 = arith.divf %27, %28 : vector<8x1xf32>
    %cst_9 = arith.constant 1.000000e+00 : f32
    %30 = vector.broadcast %cst_9 : f32 to vector<8x1xf32>
    %31 = arith.subf %30, %29 : vector<8x1xf32>
    %c0_10 = arith.constant 0 : index
    %c0_11 = arith.constant 0 : index
    %32 = vector.load %arg3[%c0_10, %c0_11] : memref<8x2xf32, #tpu.memory_space<vmem>>, vector<8x1xf32>
    tpu.vector_store %arg3[%c0_10, %c0_11], %31 {strides = array<i32>} : memref<8x2xf32, #tpu.memory_space<vmem>>, vector<8x1xf32>,
    %c0_12 = arith.constant 0 : index
    %c1_13 = arith.constant 1 : index
    %33 = vector.load %arg3[%c0_12, %c1_13] : memref<8x2xf32, #tpu.memory_space<vmem>>, vector<8x1xf32>
    tpu.vector_store %arg3[%c0_12, %c1_13], %29 {strides = array<i32>} : memref<8x2xf32, #tpu.memory_space<vmem>>, vector<8x1xf32>,
    return
  }
}

</mosaic_0001>

<llo_original>
// kernel: tpu_custom_call.1
$region0: #{tpu_custom_call.1}
  #allocation0 [shape = 'u32[]', space=smem, size = 0x4, offset = 0x4, fixed_abs, tag = 'smem constant byte address 0x4 - core index']
  #allocation1 [shape = 'u32[144,128]{1,0:T(1,128)}', space=vmem, size = 0x12000, scoped, tag = 'internal scratch']
  #allocation2 [shape = 'f32[1]{0:T(128)S(6)}', space=smem, size = 0x200, scoped, tag = 'scoped memory for tpu_custom_call.1']
  %s0 = inlined_call_operand.vmem [shape: f32[8,2], index: 0, kind: input, shape index: {}]
  %s1 = inlined_call_operand.vmem [shape: f32[4,32], index: 1, kind: input, shape index: {}]
  %s2 = inlined_call_operand.<no memory space> [shape: f32[1], index: 2, kind: input, shape index: {}]
  %s3 = inlined_call_operand.vmem [shape: f32[8,2], index: 3, kind: output, shape index: {}]
  %s4 = sld [smem:[#allocation0]]
  $region22: #{tpu_custom_call.1} parent=0
    _
  %s6 = ssub.s32 1, %s4
  %s7 = scalar_select 0, %s6, %s4
  %8 = sst [smem:[#allocation2]] %s2
  // Predicated region
  $region2: #{tpu_custom_call.1} parent=0 // pred_check
    _
  $region3: #{tpu_custom_call.1} parent=0 // pred_check_branch
    %10 = sbr.rel (0) target = $region5
  $region4: #{tpu_custom_call.1} parent=0 // pred_region
    _
  $region5: #{tpu_custom_call.1} parent=0 // pred_fallthru
    _
  // Predicated region
  $region6: #{tpu_custom_call.1} parent=0 // pred_check
    _
  $region7: #{tpu_custom_call.1} parent=0 // pred_check_branch
    %12 = sbr.rel (0) target = $region9
  $region8: #{tpu_custom_call.1} parent=0 // pred_region
    _
  $region9: #{tpu_custom_call.1} parent=0 // pred_fallthru
    _
  // Predicated region
  $region10: #{tpu_custom_call.1} parent=0 // pred_check
    _
  $region11: #{tpu_custom_call.1} parent=0 // pred_check_branch
    %14 = sbr.rel (0) target = $region13
  $region12: #{tpu_custom_call.1} parent=0 // pred_region
    _
  $region13: #{tpu_custom_call.1} parent=0 // pred_fallthru
    _
  %v15 = vld [vmem:[%s0] sm:$0xff]
  %v16 = vld [vmem:[%s1] sm:$0x1]
  %v17 = vld [vmem:[%s1 + $0x1] sm:$0x1]
  %v18 = vld [vmem:[%s1 + $0x2] sm:$0x1]
  %v19 = vld [vmem:[%s1 + $0x3] sm:$0x1]
  %21 = vset.pattern.permute.xlu0 0
  %22 = vperm.xlu0 %21, %v15
  %v23 = vpop.permute.xlu0 %22
  %v25 = vlaneseq
  %v26 = vshrl.u32 %v25, 7
  %v27 = vsub.s32 0, %v26
  %v28 = vrot.slane %v16, %v27
  %v29 = vmul.f32 %v23, %v28
  %30 = vset.pattern.permute.xlu0 1
  %31 = vperm.xlu0 %30, %v15
  %v32 = vpop.permute.xlu0 %31
  %v34 = vlaneseq
  %v35 = vshrl.u32 %v34, 7
  %v36 = vsub.s32 0, %v35
  %v37 = vrot.slane %v17, %v36
  %v38 = vmul.f32 %v32, %v37
  %v39 = vadd.f32 %v29, %v38
  %v40 = vlaneseq
  %v41 = vshrl.u32 %v40, 7
  %v42 = vsub.s32 0, %v41
  %v43 = vrot.slane %v18, %v42
  %v44 = vadd.f32 %v39, %v43
  %v45 = vmax.f32 %v44, 0.0
  %v46 = vlaneseq
  %v47 = vshrl.u32 %v46, 7
  %v48 = vsub.s32 0, %v47
  %v49 = vrot.slane %v19, %v48
  %v50 = vmul.f32 %v45, %v49
  %vm51 = vcmask 261120
  %v52 = vsel %vm51, %v50, 0.0
  %53 = vadd.xlane.f32.xlu0 %v52
  %v54 = vpop.xlane.xlu0 %53
  %s55 = sld [smem:[#allocation2]]
  %v56 = vstv %s55
  %v57 = vadd.f32 %v54, %v56
  %v58 = vxor.u32 %v57, 2147483648
  %v59 = vmul.f32 %v58, 1.442695
  %v60 = vpow.pop %v59
  %v61 = vadd.f32 %v60, 1.0
  %v62 = vrcp.pop %v61
  %v63 = vmul.f32 1.0, %v62
  %v64 = vsub.f32 1.0, %v63
  %vm65 = vcmask 7168
  %66 = vst.msk [vmem:[%s3] sm:$0xff] %vm65, %v64
  %vm67 = vcmask 15368
  %68 = vst.msk [vmem:[%s3] sm:$0xff] %vm67, %v63
  // Predicated region
  $region14: #{tpu_custom_call.1} parent=0 // pred_check
    _
  $region15: #{tpu_custom_call.1} parent=0 // pred_check_branch
    %70 = sbr.rel (0) target = $region17
  $region16: #{tpu_custom_call.1} parent=0 // pred_region
    _
  $region17: #{tpu_custom_call.1} parent=0 // pred_fallthru
    _
  // Predicated region
  $region18: #{tpu_custom_call.1} parent=0 // pred_check
    _
  $region19: #{tpu_custom_call.1} parent=0 // pred_check_branch
    %72 = sbr.rel (0) target = $region21
  $region20: #{tpu_custom_call.1} parent=0 // pred_region
    _
  $region21: #{tpu_custom_call.1} parent=0 // pred_fallthru
    _

</llo_original>
